<compile_context>
chip_gen: v7x
topology: tpu7x:2x2x1
jax: 0.10.0
libtpu: 0.0.40
codegen_flags: <defaults>
</compile_context>

<pallas_src>
import functools

import jax
import jax.numpy as jnp
from jax.experimental import pallas as pl
from jax.experimental.pallas import tpu as pltpu


def temporal_value_kernel(v_ref, o_ref, *, kernel_size, tt, total_len, num_t,
                          per_window_store):
    """v_ref: (TB, max_len, D)  ->  o_ref: (TB, tt, kernel_size * D)."""
    D = v_ref.shape[-1]

    def emit(start, n_rows):
        # Output rows [0, n_rows) of this block; window j reads input rows
        # [start + j, start + j + n_rows).
        if per_window_store:
            # D % 128 == 0 -> each store hits a vreg-aligned lane offset (unmasked vst),
            # and no concat result has to be materialized.
            for j in range(kernel_size):
                o_ref[:, 0:n_rows, j * D:(j + 1) * D] = (
                    v_ref[:, pl.ds(start + j, n_rows), :])
        else:
            windows = [v_ref[:, pl.ds(start + j, n_rows), :]
                       for j in range(kernel_size)]
            o_ref[:, 0:n_rows, :] = jnp.concatenate(windows, axis=-1)

    t = pl.program_id(1)
    base = t * tt
    if tt % 8 == 0:
        base = pl.multiple_of(base, 8)

    rem = total_len - (num_t - 1) * tt          # rows in the last time block (static)

    if num_t == 1:
        emit(0, tt)                             # single block, fully static slices
    elif rem == tt:
        emit(base, tt)                          # time axis tiles evenly
    else:
        @pl.when(t < num_t - 1)
        def _full_block():
            emit(base, tt)

        @pl.when(t == num_t - 1)
        def _partial_block():
            # Static start keeps every read inside [0, max_len); the unwritten rows
            # [rem, tt) of this output block are clipped by Pallas on writeback.
            emit((num_t - 1) * tt, rem)


def _choose_tiles(B, max_len, D, kernel_size, total_len, itemsize,
                  target_out_bytes=2 << 20, max_in_bytes=4 << 20,
                  min_out_bytes=256 << 10, min_steps=4):
    """Byte-budget tile sizes: TB batch rows, Tt output time rows."""
    in_row_bytes = max_len * D * itemsize

    # Batch tile: bound the full-time-length input block (~4 MiB).
    tb = max(B, 1)
    while tb > 1 and tb * in_row_bytes > max_in_bytes:
        tb = (tb + 1) // 2

    def t_row_bytes(tb_):
        return tb_ * kernel_size * D * itemsize

    # Time tile: aim the output block at ~target_out_bytes, multiple-of-8 rows
    # (the output's sublane dim), or the full total_len when it is small.
    tt = max(1, target_out_bytes // max(t_row_bytes(tb), 1))
    if tt >= 8:
        tt -= tt % 8
    tt = min(tt, total_len)
    if tt < total_len and tt % 8 != 0:
        tt = min(((tt + 7) // 8) * 8, total_len)

    # Prefer a few grid steps (pipelining; megacore on v7x) as long as blocks stay
    # big enough to amortize the ~0.35 us per-step overhead.
    def steps(tb_, tt_):
        return pl.cdiv(B, tb_) * pl.cdiv(total_len, tt_)

    while steps(tb, tt) < min_steps:
        half_t = tt // 2
        if half_t >= 8:
            half_t -= half_t % 8
        if (half_t >= 8 and half_t < tt
                and half_t * t_row_bytes(tb) >= min_out_bytes):
            tt = half_t
            continue
        if tb > 1:
            tb = (tb + 1) // 2
            continue
        break
    return tb, tt


def temporal_value_forward(value, kernel_size, *, tb=None, tt=None):
    """value: (B, max_len, D) -> (B, total_len, kernel_size, D)."""
    B, max_len, D = value.shape
    assert max_len >= kernel_size, "sequence shorter than kernel_size"
    total_len = max_len - kernel_size + 1
    itemsize = jnp.dtype(value.dtype).itemsize

    auto_tb, auto_tt = _choose_tiles(B, max_len, D, kernel_size, total_len, itemsize)
    tb = auto_tb if tb is None else max(1, min(tb, B))
    tt = auto_tt if tt is None else max(1, min(tt, total_len))
    if tt < total_len and tt % 8 != 0:          # keep the (8,128) tiling rule
        tt = min(((tt + 7) // 8) * 8, total_len)

    num_b = pl.cdiv(B, tb)
    num_t = pl.cdiv(total_len, tt)
    per_window_store = (D % 128 == 0)

    kern = functools.partial(
        temporal_value_kernel,
        kernel_size=kernel_size, tt=tt, total_len=total_len, num_t=num_t,
        per_window_store=per_window_store)

    # VMEM for the double-buffered blocks (+ headroom), kept well under v7x's 64 MiB.
    in_block = tb * max_len * D * itemsize
    out_block = tb * tt * kernel_size * D * itemsize
    vmem_limit = int(min(max(2 * (in_block + out_block) + (2 << 20), 16 << 20), 48 << 20))

    bytes_accessed = (B * max_len * D + B * total_len * kernel_size * D) * itemsize
    cost = pl.CostEstimate(flops=0, transcendentals=0, bytes_accessed=bytes_accessed)

    out_flat = pl.pallas_call(
        kern,
        out_shape=jax.ShapeDtypeStruct((B, total_len, kernel_size * D), value.dtype),
        grid=(num_b, num_t),
        in_specs=[pl.BlockSpec((tb, max_len, D), lambda b, t: (b, 0, 0))],
        out_specs=pl.BlockSpec((tb, tt, kernel_size * D), lambda b, t: (b, t, 0)),
        compiler_params=pltpu.CompilerParams(
            dimension_semantics=("parallel", "parallel"),
            vmem_limit_bytes=vmem_limit,
        ),
        cost_estimate=cost,
    )(value)

    # Free metadata reshape: (B, total_len, ks*D) and (B, total_len, ks, D) share layout.
    return out_flat.reshape(B, total_len, kernel_size, D)


def temporal_value_reference(value, kernel_size):
    """Pure-JAX reference matching the PyTorch module."""
    B, max_len, D = value.shape
    total_len = max_len - kernel_size + 1
    return jnp.stack(
        [value[:, i:i + kernel_size, :] for i in range(total_len)], axis=1)


if __name__ == "__main__":
    key = jax.random.PRNGKey(0)

    # Case 1: small module shapes (D < 128 -> concat path; single time block).
    B, max_len, D, ks = 2, 8, 16, 3
    value = jax.random.normal(key, (B, max_len, D), dtype=jnp.float32)
    out = jax.block_until_ready(temporal_value_forward(value, ks))
    ref = temporal_value_reference(value, ks)
    assert out.shape == ref.shape == (B, max_len - ks + 1, ks, D), out.shape
    assert jnp.all(jnp.isfinite(out))
    assert jnp.array_equal(out, ref), float(jnp.max(jnp.abs(out - ref)))

    # Case 2: exercises the per-window-store path (D % 128 == 0), a partial trailing
    # time block (total_len % tt != 0) and a partial batch block (B % tb != 0).
    B2, max_len2, D2, ks2 = 3, 40, 128, 3
    value2 = jax.random.normal(jax.random.PRNGKey(0), (B2, max_len2, D2),
                               dtype=jnp.float32)
    out2 = jax.block_until_ready(temporal_value_forward(value2, ks2, tb=2, tt=16))
    ref2 = temporal_value_reference(value2, ks2)
    assert out2.shape == ref2.shape, (out2.shape, ref2.shape)
    assert jnp.array_equal(out2, ref2), float(jnp.max(jnp.abs(out2 - ref2)))

    print("KERNEL_OK")
</pallas_src>

<mosaic_0001>
module attributes {stable_mosaic.version = 11 : i64} {
  func.func @temporal_value_kernel(%arg0: i32, %arg1: i32, %arg2: memref<1x8x16xf32, #tpu.memory_space<vmem>>, %arg3: memref<1x6x48xf32, #tpu.memory_space<vmem>>) attributes {dimension_semantics = [#tpu.dimension_semantics<parallel>, #tpu.dimension_semantics<parallel>], iteration_bounds = array<i64: 2, 1>, scalar_prefetch = 0 : i64, scratch_operands = 0 : i64, tpu.core_type = #tpu.core_type<tc>, window_params = [{transform_indices = @transform_0, window_bounds = array<i64: 1, 8, 16>}, {transform_indices = @transform_1, window_bounds = array<i64: 1, 6, 48>}]} {
    %c0 = arith.constant 0 : index
    %c0_0 = arith.constant 0 : index
    %c0_1 = arith.constant 0 : index
    %0 = vector.load %arg2[%c0, %c0_0, %c0_1] : memref<1x8x16xf32, #tpu.memory_space<vmem>>, vector<1x6x16xf32>
    %c0_2 = arith.constant 0 : index
    %c1 = arith.constant 1 : index
    %c0_3 = arith.constant 0 : index
    %1 = vector.load %arg2[%c0_2, %c1, %c0_3] : memref<1x8x16xf32, #tpu.memory_space<vmem>>, vector<1x6x16xf32>
    %c0_4 = arith.constant 0 : index
    %c2 = arith.constant 2 : index
    %c0_5 = arith.constant 0 : index
    %2 = vector.load %arg2[%c0_4, %c2, %c0_5] : memref<1x8x16xf32, #tpu.memory_space<vmem>>, vector<1x6x16xf32>
    %3 = tpu.concatenate %0, %1, %2 in 2 : vector<1x6x16xf32>, vector<1x6x16xf32>, vector<1x6x16xf32> -> vector<1x6x48xf32>
    %c0_6 = arith.constant 0 : index
    %c0_7 = arith.constant 0 : index
    %c0_8 = arith.constant 0 : index
    %4 = vector.load %arg3[%c0_6, %c0_7, %c0_8] : memref<1x6x48xf32, #tpu.memory_space<vmem>>, vector<1x6x48xf32>
    tpu.vector_store %arg3[%c0_6, %c0_7, %c0_8], %3 {strides = array<i32>} : memref<1x6x48xf32, #tpu.memory_space<vmem>>, vector<1x6x48xf32>,
    return
  }
  func.func @transform_0(%arg0: i32, %arg1: i32) -> (i32, i32, i32) {
    %c0_i32 = arith.constant 0 : i32
    %c0_i32_0 = arith.constant 0 : i32
    %c0_i32_1 = arith.constant 0 : i32
    return %arg0, %c0_i32, %c0_i32_0 : i32, i32, i32
  }
  func.func @transform_1(%arg0: i32, %arg1: i32) -> (i32, i32, i32) {
    %c0_i32 = arith.constant 0 : i32
    %c0_i32_0 = arith.constant 0 : i32
    return %arg0, %arg1, %c0_i32 : i32, i32, i32
  }
}

</mosaic_0001>

<llo_original>
// kernel: tpu_custom_call.1
$region0: #{tpu_custom_call.1}
  #allocation0 [shape = 'u32[]', space=smem, size = 0x4, offset = 0x4, fixed_abs, tag = 'smem constant byte address 0x4 - core index']
  #allocation1 [shape = 'u32[144,128]{1,0:T(1,128)}', space=vmem, size = 0x12000, scoped, tag = 'internal scratch']
  %s0 = inlined_call_operand.hbm [shape: f32[2,8,16], index: 0, kind: input, shape index: {}]
  %s1 = inlined_call_operand.vmem [shape: f32[2,6,48], index: 1, kind: output, shape index: {}]
  %s2 = sld [smem:[#allocation0]]
  $region41: #{tpu_custom_call.1} parent=0
    _
  %s4 = ssub.s32 1, %s2
  %s5 = scalar_select 0, %s4, %s2
  $region1: #{tpu_custom_call.1} parent=0
    #allocation2 [shape = 'u8[8192]{0}', space=vmem, size = 0x2000, scoped, tag = 'input window, operand 0']
    #allocation3 [shape = 's32[2]{0}', space=sflag, size = 0x8, scoped, tag = 'scoped memory for tpu_custom_call.1']
    %6 = vsyncpa [#allocation3], 0
    %s7 = scalar_lea.sflag [#allocation3], 1
    %8 = vsyncpa %s7, 0
    loop: start=0, step=1, limit=4
    $region2: #{tpu_custom_call.1} parent=1 // loop_pre_header
      _
    $region3: #{tpu_custom_call.1} parent=1 // loop_header
      %s10 = sphi 0, %s14
      %p11 = scmp.ge.s32.totalorder %s10, 4
      %s17 = sphi 0, %s29
      %s18 = sphi 0, %s25
      %s19 = sphi 0, %s17
      %s20 = sphi 0, %s18
      %s21 = sphi 0, %s19
      %s22 = sphi 0, %s20
      %s32 = sphi 0, %s34
      %s35 = sphi 0, %s32
      %s36 = sphi 0, %s35
      %s52 = sphi 0, %s36
      %s60 = sphi 0, %s62
      %s63 = sphi 0, %s60
      %s64 = sphi 0, %s63
      %s80 = sphi 0, %s64
    $region4: #{tpu_custom_call.1} parent=1 // loop_header_branch
      %13 = sbr.rel (%p11) target = $region8
    $region5: #{tpu_custom_call.1} parent=1 // loop_body
      %s15 = ssub.s32 %s10, 1
      %s16 = ssub.s32 %s10, 2
      %s23 = sadd.s32 1, %s18
      %p24 = scmp.ge.s32.totalorder %s23, 1
      %s25 = scalar_select %p24, 0, %s23
      %s26 = sadd.s32 1, %s17
      %s27 = scalar_select %p24, %s26, %s17
      %p28 = scmp.ge.s32.totalorder %s27, 2
      %s29 = scalar_select %p28, 0, %s27
      %s30 = ssub.s32 %s17, %s29
      %p31 = scmp.eq.s32.totalorder %s30, 0
      %s33 = sadd.s32 %s32, 1
      %s34 = scalar_select %p31, %s32, %s33
      %p37 = pneg %p31
      %p38 = scmp.eq.s32.totalorder %s10, 1
      %p39 = por %p37, %p38
      %p40 = scmp.ne.s32.totalorder %s32, %s35
      %p41 = scmp.eq.s32.totalorder %s10, 0
      %p42 = por %p40, %p41
      %p43 = scmp.ne.s32.totalorder %s32, %s35
      %p44 = scmp.eq.s32.totalorder %s15, 1
      %p45 = por %p43, %p44
      %p46 = scmp.ne.s32.totalorder %s35, %s36
      %p47 = scmp.eq.s32.totalorder %s15, 0
      %p48 = por %p46, %p47
      %p49 = scmp.ne.s32.totalorder %s35, %s36
      %p50 = scmp.eq.s32.totalorder %s16, 1
      %p51 = por %p49, %p50
      %p53 = scmp.ne.s32.totalorder %s36, %s52
      %p54 = scmp.eq.s32.totalorder %s16, 0
      %p55 = por %p53, %p54
      %s56 = ssub.s32 %s17, %s29
      %s57 = ssub.s32 %s18, %s25
      %s58 = sor.u32 %s56, %s57
      %p59 = scmp.eq.s32.totalorder %s58, 0
      %s61 = sadd.s32 %s60, 1
      %s62 = scalar_select %p59, %s60, %s61
      %p65 = pneg %p59
      %p66 = scmp.eq.s32.totalorder %s10, 1
      %p67 = por %p65, %p66
      %p68 = scmp.ne.s32.totalorder %s60, %s63
      %p69 = scmp.eq.s32.totalorder %s10, 0
      %p70 = por %p68, %p69
      %p71 = scmp.ne.s32.totalorder %s60, %s63
      %p72 = scmp.eq.s32.totalorder %s15, 1
      %p73 = por %p71, %p72
      %p74 = scmp.ne.s32.totalorder %s63, %s64
      %p75 = scmp.eq.s32.totalorder %s15, 0
      %p76 = por %p74, %p75
      %p77 = scmp.ne.s32.totalorder %s63, %s64
      %p78 = scmp.eq.s32.totalorder %s16, 1
      %p79 = por %p77, %p78
      %p81 = scmp.ne.s32.totalorder %s64, %s80
      %p82 = scmp.eq.s32.totalorder %s16, 0
      %p83 = por %p81, %p82
      %p84 = scmp.le.s32.totalorder 1, %s10
      %p85 = scmp.lt.s32.totalorder %s10, 3
      %p86 = pnand %p84, %p85
      %p87 = pneg %p86
      // Predicated region
      $region9: #{tpu_custom_call.1} parent=5 // pred_check
        _
      $region10: #{tpu_custom_call.1} parent=5 // pred_check_branch
        %89 = sbr.rel (%p86) target = $region12
      $region11: #{tpu_custom_call.1} parent=5 // pred_region
        %s90 = ssub.s32 %s10, 1
      $region12: #{tpu_custom_call.1} parent=5 // pred_fallthru
        _
      %p91 = scmp.lt.s32.totalorder %s10, 2
      // Predicated region
      $region13: #{tpu_custom_call.1} parent=5 // pred_check
        %p92 = pneg %p91
      $region14: #{tpu_custom_call.1} parent=5 // pred_check_branch
        %94 = sbr.rel (%p92) target = $region16
      $region15: #{tpu_custom_call.1} parent=5 // pred_region
        // Predicated region
        $region17: #{tpu_custom_call.1} parent=15 // pred_check
          %p95 = pneg %p42
        $region18: #{tpu_custom_call.1} parent=15 // pred_check_branch
          %97 = sbr.rel (%p95) target = $region20
        $region19: #{tpu_custom_call.1} parent=15 // pred_region
          %s98 = sand.u32 %s32, 1
          %s99 = scalar_lea.sflag [#allocation3], %s98
          %s100 = sand.u32 %s32, 1
          %s101 = smul.addr %s100, 8
          %s102 = scalar_lea.vmem [#allocation2], %s101
          %s104 = ssub.s32 128, 128
          %105 = vsyncadd %s99, %s104
          %s106 = smul.addr %s17, 128
          %s107 = scalar_lea.hbm %s0, %s106
          %s109 = sshll.u32 %s102, 4
          %s110 = int_to_ptr.vmem [resolvable:$true] %s109
          %112 = dma.hbm_to_vmem [thread:$0]  %s107, 128, %s110, %s99
        $region20: #{tpu_custom_call.1} parent=15 // pred_fallthru
          _
      $region16: #{tpu_custom_call.1} parent=5 // pred_fallthru
        _
      %p113 = scmp.le.s32.totalorder 1, %s10
      %p114 = scmp.lt.s32.totalorder %s10, 3
      %p115 = pnand %p113, %p114
      %p116 = pneg %p115
      // Predicated region
      $region21: #{tpu_custom_call.1} parent=5 // pred_check
        _
      $region22: #{tpu_custom_call.1} parent=5 // pred_check_branch
        %118 = sbr.rel (%p115) target = $region24
      $region23: #{tpu_custom_call.1} parent=5 // pred_region
        %s119 = ssub.s32 %s10, 1
        %s120 = sand.u32 %s35, 1
        %s121 = scalar_lea.sflag [#allocation3], %s120
        %s122 = sand.u32 %s35, 1
        %s123 = smul.addr %s122, 8
        %s124 = scalar_lea.vmem [#allocation2], %s123
        // Predicated region
        $region25: #{tpu_custom_call.1} parent=23 // pred_check
          %p125 = pneg %p48
        $region26: #{tpu_custom_call.1} parent=23 // pred_check_branch
          %127 = sbr.rel (%p125) target = $region28
        $region27: #{tpu_custom_call.1} parent=23 // pred_region
          %128 = dma.done %s121, 128
        $region28: #{tpu_custom_call.1} parent=23 // pred_fallthru
          _
        %s129 = sand.u32 %s35, 1
        %s130 = scalar_lea.sflag [#allocation3], %s129
        %s131 = sand.u32 %s35, 1
        %s132 = smul.addr %s131, 8
        %s133 = scalar_lea.vmem [#allocation2], %s132
        %p134 = pneg %p48
        %p135 = pneg %p45
        %p136 = pneg %p76
        %p137 = pneg %p73
        %p138 = scmp.lt.s32.totalorder %s19, 1
        %s139 = scalar_select %p138, %s19, 1
        %p140 = scmp.lt.s32.totalorder %s20, 0
        %s141 = scalar_select %p140, %s20, 0
        %s142 = sadd.s32 %s141, %s139
        %s143 = smul.addr %s142, 8
        %s144 = scalar_lea.vmem %s1, %s143
        %p145 = scmp.lt.s32.totalorder %s19, 1
        %s146 = scalar_select %p145, %s19, 1
        %p147 = scmp.lt.s32.totalorder %s20, 0
        %s148 = scalar_select %p147, %s20, 0
        %s149 = sadd.s32 %s148, %s146
        %s150 = smul.addr %s149, 8
        %s151 = scalar_lea.vmem %s1, %s150
        %v152 = vld [vmem:[%s124] sm:$0x3f]
        %v153 = vld [vmem:[%s124 + $0x1] sm:$0x3f]
        %v154 = vld [vmem:[%s124 + $0x2] sm:$0x3f]
        %156 = vrot.lane.b32.xlu0 %v153, 16
        %v157 = vpop.permute.xlu0 %156
        %160 = vrot.lane.b32.xlu0 %v154, 32
        %v161 = vpop.permute.xlu0 %160
        %vm163 = vcmask 130048
        %v164 = vsel %vm163, %v152, %v157
        %vm165 = vcmask 261120
        %v166 = vsel %vm165, %v164, %v161
        %vm167 = vcmask 390144
        %168 = vst.msk [vmem:[%s151] sm:$0x3f] %vm167, %v166
        %p169 = scmp.lt.s32.totalorder %s19, 1
        %s170 = scalar_select %p169, %s19, 1
        %p171 = scmp.lt.s32.totalorder %s20, 0
        %s172 = scalar_select %p171, %s20, 0
        %s173 = sadd.s32 %s172, %s170
        %s174 = smul.addr %s173, 8
        %s175 = scalar_lea.vmem %s1, %s174
        // Predicated region
        $region29: #{tpu_custom_call.1} parent=23 // pred_check
          %p176 = pneg %p73
        $region30: #{tpu_custom_call.1} parent=23 // pred_check_branch
          %178 = sbr.rel (%p176) target = $region32
        $region31: #{tpu_custom_call.1} parent=23 // pred_region
          _
        $region32: #{tpu_custom_call.1} parent=23 // pred_fallthru
          _
      $region24: #{tpu_custom_call.1} parent=5 // pred_fallthru
        _
      %p179 = scmp.le.s32.totalorder 2, %s10
      // Predicated region
      $region33: #{tpu_custom_call.1} parent=5 // pred_check
        %p180 = pneg %p179
      $region34: #{tpu_custom_call.1} parent=5 // pred_check_branch
        %182 = sbr.rel (%p180) target = $region36
      $region35: #{tpu_custom_call.1} parent=5 // pred_region
        %s183 = ssub.s32 %s10, 2
        // Predicated region
        $region37: #{tpu_custom_call.1} parent=35 // pred_check
          %p184 = pneg %p79
        $region38: #{tpu_custom_call.1} parent=35 // pred_check_branch
          %186 = sbr.rel (%p184) target = $region40
        $region39: #{tpu_custom_call.1} parent=35 // pred_region
          %p187 = scmp.lt.s32.totalorder %s21, 1
          %s188 = scalar_select %p187, %s21, 1
          %p189 = scmp.lt.s32.totalorder %s22, 0
          %s190 = scalar_select %p189, %s22, 0
          %s191 = sadd.s32 %s190, %s188
          %s192 = smul.addr %s191, 8
          %s193 = scalar_lea.vmem %s1, %s192
        $region40: #{tpu_custom_call.1} parent=35 // pred_fallthru
          _
      $region36: #{tpu_custom_call.1} parent=5 // pred_fallthru
        _
    $region6: #{tpu_custom_call.1} parent=1 // loop_footer
      %s14 = sadd.s32 1, %s10
    $region7: #{tpu_custom_call.1} parent=1 // loop_footer_branch
      %9 = sbr.rel target = $region3
    $region8: #{tpu_custom_call.1} parent=1 // loop_exit
      _
    %194 = vsyncpa [#allocation3], 1
    %s195 = scalar_lea.sflag [#allocation3], 1
    %196 = vsyncpa %s195, 1

</llo_original>
